<compile_context>
chip_gen: v7x
topology: tpu7x:2x2x1
jax: 0.10.0
libtpu: 0.0.40
codegen_flags: <defaults>
</compile_context>

<pallas_src>
import jax
import jax.numpy as jnp
from jax.experimental import pallas as pl
from jax.experimental.pallas import tpu as pltpu

_LANES = 128


def _round_up(x, m):
    return (x + m - 1) // m * m


def _logreg_kernel(x_ref, w_ref, b_ref, o_ref):
    # x_ref: (tile_b, fk)    VMEM (streamed, double-buffered)
    # w_ref: (fk, n_out)     VMEM (resident: constant index_map)
    # b_ref: (1, 1)          SMEM scalar
    # o_ref: (n_out, tile_b) VMEM -- batch rows on the lane axis (lane-dense)
    logits = jnp.dot(x_ref[...], w_ref[...],
                     preferred_element_type=jnp.float32)     # (tile_b, n_out) f32
    # Small transpose on the otherwise-idle XLU: sigmoid then touches
    # tile_b*n_out/1024 vregs instead of tile_b/8, and the store is unmasked.
    logits_t = logits.T                                       # (n_out, tile_b)
    o_ref[...] = jax.nn.sigmoid(logits_t + b_ref[0, 0]).astype(o_ref.dtype)


def logistic_regression(x, weight, bias, *, tile_b=8192, vmem_limit_bytes=None):
    """sigmoid(x @ weight.T + bias).

    x: (B, F); weight: (1, F) (PyTorch nn.Linear layout); bias: (1,).
    Returns (B, 1) float32.
    """
    B, F = x.shape
    if not jnp.issubdtype(x.dtype, jnp.floating):
        x = x.astype(jnp.float32)
    cdt = x.dtype                    # stream x in its native dtype: no extra HBM pass
    w = jnp.asarray(weight, dtype=cdt).reshape(F)
    b = jnp.asarray(bias, dtype=jnp.float32).reshape(1, 1)    # SMEM scalar

    # ---- feature axis: lane-dense without any padded HBM copy of x ----------
    if F < _LANES and _LANES % F == 0:
        p = _LANES // F              # logical rows packed per 128-lane physical row
        if B % p:
            # append < p zero rows so the packing reshape below stays contiguous
            x = jnp.concatenate([x, jnp.zeros((p - B % p, F), cdt)], axis=0)
        rows = x.shape[0] // p
        fk = _LANES
        x_in = x.reshape(rows, fk)   # contiguous reshape: no data movement
        n_out = p
        w_mat = jnp.zeros((fk, p), cdt)   # block-diagonal weight -> p logits per row
        for j in range(p):
            w_mat = w_mat.at[j * F:(j + 1) * F, j].set(w)
    else:
        # No feature padding: x block's last dim equals the full extent F.
        # TODO(synk): extremely wide F (> ~20k f32 features) would need a
        # K-tiled accumulating variant; not relevant for logistic regression.
        p, rows, fk, n_out = 1, B, F, 1
        x_in = x
        w_mat = w.reshape(F, 1)

    # ---- batch tiling: big double-buffered tiles, >= 2 grid steps if possible
    itemsize = jnp.dtype(cdt).itemsize
    x_budget = 12 << 20                      # dbl-buffered x budget; fits v5e's 16 MiB
    row_bytes = max(fk, _LANES) * itemsize   # VMEM rows pad up to 128 lanes
    cap = max(_LANES, (x_budget // (2 * row_bytes)) // _LANES * _LANES)
    tile_b = min(max(_LANES, _round_up(int(tile_b), _LANES)), cap)
    if rows >= 2 * _LANES:
        # keep at least 2 grid steps so v7x's two TensorCores split the batch axis
        tile_b = min(tile_b, _round_up(pl.cdiv(rows, 2), _LANES))
    if rows <= tile_b:
        tile_b = rows                        # single full-extent block (any size legal)
    grid = pl.cdiv(rows, tile_b)             # last block may be ragged; writeback masked

    cp_kwargs = dict(dimension_semantics=("parallel",))
    if vmem_limit_bytes is not None:
        cp_kwargs["vmem_limit_bytes"] = int(vmem_limit_bytes)

    out = pl.pallas_call(
        _logreg_kernel,
        out_shape=jax.ShapeDtypeStruct((n_out, rows), jnp.float32),
        grid_spec=pl.GridSpec(
            grid=(grid,),
            in_specs=[
                pl.BlockSpec((tile_b, fk), lambda i: (i, 0)),        # streamed x tiles
                pl.BlockSpec((fk, n_out), lambda i: (0, 0)),         # VMEM-resident weight
                pl.BlockSpec(memory_space=pltpu.MemorySpace.SMEM),   # bias scalar
            ],
            out_specs=pl.BlockSpec((n_out, tile_b), lambda i: (0, i)),
        ),
        compiler_params=pltpu.CompilerParams(**cp_kwargs),
    )(x_in, w_mat, b)

    # out[j, r] = sigmoid(logit of logical row r*p + j) -> logical row-major order.
    return out.T.reshape(rows * p, 1)[:B]


if __name__ == "__main__":
    key = jax.random.PRNGKey(0)
    kx, kw, kb = jax.random.split(key, 3)

    def ref(x, w, b):
        return jax.nn.sigmoid(x @ w.T + b)

    # Case 1: canonical small case (packed path: F=32 -> 4 rows per 128 lanes).
    batch, n_features = 8, 32
    bound = 1.0 / (n_features ** 0.5)
    x = jax.random.normal(kx, (batch, n_features), dtype=jnp.float32)
    weight = jax.random.uniform(kw, (1, n_features), jnp.float32, -bound, bound)
    bias = jax.random.uniform(kb, (1,), jnp.float32, -bound, bound)

    y = logistic_regression(x, weight, bias)
    jax.block_until_ready(y)
    assert y.shape == (batch, 1)
    assert jnp.allclose(y, ref(x, weight, bias), atol=1e-5, rtol=1e-5)

    # Case 2: packed path with batch % pack != 0 and a ragged 2-step grid.
    b2, f2 = 1030, 32
    x2 = jax.random.normal(kx, (b2, f2), dtype=jnp.float32)
    w2 = jax.random.uniform(kw, (1, f2), jnp.float32, -bound, bound)
    y2 = logistic_regression(x2, w2, bias, tile_b=256)
    jax.block_until_ready(y2)
    assert y2.shape == (b2, 1)
    assert jnp.allclose(y2, ref(x2, w2, bias), atol=1e-5, rtol=1e-5)

    # Case 3: feature dim that does not divide 128 (unpacked path, no padding).
    b3, f3 = 9, 130
    x3 = jax.random.normal(kx, (b3, f3), dtype=jnp.float32)
    w3 = jax.random.uniform(kw, (1, f3), jnp.float32, -bound, bound)
    y3 = logistic_regression(x3, w3, bias)
    jax.block_until_ready(y3)
    assert y3.shape == (b3, 1)
    assert jnp.allclose(y3, ref(x3, w3, bias), atol=1e-5, rtol=1e-5)

    print("KERNEL_OK")
</pallas_src>

<mosaic_0001>
module attributes {stable_mosaic.version = 11 : i64} {
  func.func @_logreg_kernel(%arg0: i32, %arg1: memref<2x128xf32, #tpu.memory_space<vmem>>, %arg2: memref<128x4xf32, #tpu.memory_space<vmem>>, %arg3: memref<1x1xf32, #tpu.memory_space<smem>>, %arg4: memref<4x2xf32, #tpu.memory_space<vmem>>) attributes {dimension_semantics = [#tpu.dimension_semantics<parallel>], iteration_bounds = array<i64: 1>, scalar_prefetch = 0 : i64, scratch_operands = 0 : i64, tpu.core_type = #tpu.core_type<tc>, window_params = [{transform_indices = @transform_0, window_bounds = array<i64: 2, 128>}, {pipeline_mode = #tpu.pipeline_mode<synchronous>, transform_indices = @transform_1, window_bounds = array<i64: 128, 4>}, {transform_indices = @transform_2, window_bounds = array<i64: 1, 1>}, {transform_indices = @transform_3, window_bounds = array<i64: 4, 2>}]} {
    %c0 = arith.constant 0 : index
    %c0_0 = arith.constant 0 : index
    %0 = vector.load %arg1[%c0, %c0_0] : memref<2x128xf32, #tpu.memory_space<vmem>>, vector<2x128xf32>
    %c0_1 = arith.constant 0 : index
    %c0_2 = arith.constant 0 : index
    %1 = vector.load %arg2[%c0_1, %c0_2] : memref<128x4xf32, #tpu.memory_space<vmem>>, vector<128x4xf32>
    %cst = arith.constant dense<0.000000e+00> : vector<2x4xf32>
    %2 = tpu.matmul %0, %1, %cst {dimension_numbers = #tpu.dot_dimension_numbers<[1], [0], [0], [1], [0, 0, 1, 1], [], []>} : vector<2x128xf32>, vector<128x4xf32>, vector<2x4xf32> -> vector<2x4xf32>
    %3 = tpu.transpose %2, [1, 0] : vector<2x4xf32> -> vector<4x2xf32>
    %c0_3 = arith.constant 0 : index
    %c0_4 = arith.constant 0 : index
    %4 = memref.load %arg3[%c0_3, %c0_4] : memref<1x1xf32, #tpu.memory_space<smem>>
    %5 = vector.broadcast %4 : f32 to vector<4x2xf32>
    %6 = arith.addf %3, %5 : vector<4x2xf32>
    %7 = arith.negf %6 : vector<4x2xf32>
    %8 = math.exp %7 : vector<4x2xf32>
    %cst_5 = arith.constant 1.000000e+00 : f32
    %9 = vector.broadcast %cst_5 : f32 to vector<4x2xf32>
    %10 = arith.addf %9, %8 : vector<4x2xf32>
    %11 = arith.divf %9, %10 : vector<4x2xf32>
    %c0_6 = arith.constant 0 : index
    %c0_7 = arith.constant 0 : index
    %12 = vector.load %arg4[%c0_6, %c0_7] : memref<4x2xf32, #tpu.memory_space<vmem>>, vector<4x2xf32>
    tpu.vector_store %arg4[%c0_6, %c0_7], %11 {strides = array<i32>} : memref<4x2xf32, #tpu.memory_space<vmem>>, vector<4x2xf32>,
    return
  }
  func.func @transform_0(%arg0: i32) -> (i32, i32) {
    %c0_i32 = arith.constant 0 : i32
    %c0_i32_0 = arith.constant 0 : i32
    return %arg0, %c0_i32 : i32, i32
  }
  func.func @transform_1(%arg0: i32) -> (i32, i32) {
    %c0_i32 = arith.constant 0 : i32
    %c0_i32_0 = arith.constant 0 : i32
    %c0_i32_1 = arith.constant 0 : i32
    return %c0_i32, %c0_i32_0 : i32, i32
  }
  func.func @transform_2(%arg0: i32) -> (i32, i32) {
    %c0_i32 = arith.constant 0 : i32
    %c0_i32_0 = arith.constant 0 : i32
    %c0_i32_1 = arith.constant 0 : i32
    return %c0_i32, %c0_i32_0 : i32, i32
  }
  func.func @transform_3(%arg0: i32) -> (i32, i32) {
    %c0_i32 = arith.constant 0 : i32
    %c0_i32_0 = arith.constant 0 : i32
    return %c0_i32, %arg0 : i32, i32
  }
}

</mosaic_0001>

<llo_original>
// kernel: tpu_custom_call.1
$region0: #{tpu_custom_call.1}
  #allocation0 [shape = 'u32[]', space=smem, size = 0x4, offset = 0x4, fixed_abs, tag = 'smem constant byte address 0x4 - core index']
  #allocation1 [shape = 'u32[144,128]{1,0:T(1,128)}', space=vmem, size = 0x12000, scoped, tag = 'internal scratch']
  #allocation2 [shape = 'f32[1,1]{1,0:T(1,128)S(6)}', space=smem, size = 0x200, scoped, tag = 'scoped memory for tpu_custom_call.1']
  %s0 = inlined_call_operand.vmem [shape: f32[2,128], index: 0, kind: input, shape index: {}]
  %s1 = inlined_call_operand.vmem [shape: f32[128,4], index: 1, kind: input, shape index: {}]
  %s2 = inlined_call_operand.<no memory space> [shape: f32[1,1], index: 2, kind: input, shape index: {}]
  %s3 = inlined_call_operand.vmem [shape: f32[4,2], index: 3, kind: output, shape index: {}]
  %s4 = sld [smem:[#allocation0]]
  $region22: #{tpu_custom_call.1} parent=0
    _
  %s6 = ssub.s32 1, %s4
  %s7 = scalar_select 0, %s6, %s4
  %8 = sst [smem:[#allocation2]] %s2
  // Predicated region
  $region2: #{tpu_custom_call.1} parent=0 // pred_check
    _
  $region3: #{tpu_custom_call.1} parent=0 // pred_check_branch
    %10 = sbr.rel (0) target = $region5
  $region4: #{tpu_custom_call.1} parent=0 // pred_region
    _
  $region5: #{tpu_custom_call.1} parent=0 // pred_fallthru
    _
  // Predicated region
  $region6: #{tpu_custom_call.1} parent=0 // pred_check
    _
  $region7: #{tpu_custom_call.1} parent=0 // pred_check_branch
    %12 = sbr.rel (0) target = $region9
  $region8: #{tpu_custom_call.1} parent=0 // pred_region
    _
  $region9: #{tpu_custom_call.1} parent=0 // pred_fallthru
    _
  // Predicated region
  $region10: #{tpu_custom_call.1} parent=0 // pred_check
    _
  $region11: #{tpu_custom_call.1} parent=0 // pred_check_branch
    %14 = sbr.rel (0) target = $region13
  $region12: #{tpu_custom_call.1} parent=0 // pred_region
    _
  $region13: #{tpu_custom_call.1} parent=0 // pred_fallthru
    _
  %v15 = vld [vmem:[%s0] sm:$0x3]
  %v16 = vld [vmem:[%s1] sm:$0xff]
  %v17 = vld [vmem:[%s1 + $0x8] sm:$0xff]
  %v18 = vld [vmem:[%s1 + $0x10] sm:$0xff]
  %v19 = vld [vmem:[%s1 + $0x18] sm:$0xff]
  %v20 = vld [vmem:[%s1 + $0x20] sm:$0xff]
  %v21 = vld [vmem:[%s1 + $0x28] sm:$0xff]
  %v22 = vld [vmem:[%s1 + $0x30] sm:$0xff]
  %v23 = vld [vmem:[%s1 + $0x38] sm:$0xff]
  %v24 = vld [vmem:[%s1 + $0x40] sm:$0xff]
  %v25 = vld [vmem:[%s1 + $0x48] sm:$0xff]
  %v26 = vld [vmem:[%s1 + $0x50] sm:$0xff]
  %v27 = vld [vmem:[%s1 + $0x58] sm:$0xff]
  %v28 = vld [vmem:[%s1 + $0x60] sm:$0xff]
  %v29 = vld [vmem:[%s1 + $0x68] sm:$0xff]
  %v30 = vld [vmem:[%s1 + $0x70] sm:$0xff]
  %v31 = vld [vmem:[%s1 + $0x78] sm:$0xff]
  %32 = vmatprep.subr.mxu0 0.0
  %33 = vmatpush1.msra.mxu0 %v16
  %34 = vmatprep.subr.mxu0 0.0
  %35 = vmatpush1.msra.mxu0 %v17
  %36 = vmatprep.subr.mxu0 0.0
  %37 = vmatpush1.msra.mxu0 %v18
  %38 = vmatprep.subr.mxu0 0.0
  %39 = vmatpush1.msra.mxu0 %v19
  %40 = vmatprep.subr.mxu0 0.0
  %41 = vmatpush1.msra.mxu0 %v20
  %42 = vmatprep.subr.mxu0 0.0
  %43 = vmatpush1.msra.mxu0 %v21
  %44 = vmatprep.subr.mxu0 0.0
  %45 = vmatpush1.msra.mxu0 %v22
  %46 = vmatprep.subr.mxu0 0.0
  %47 = vmatpush1.msra.mxu0 %v23
  %48 = vmatprep.subr.mxu0 0.0
  %49 = vmatpush1.msra.mxu0 %v24
  %50 = vmatprep.subr.mxu0 0.0
  %51 = vmatpush1.msra.mxu0 %v25
  %52 = vmatprep.subr.mxu0 0.0
  %53 = vmatpush1.msra.mxu0 %v26
  %54 = vmatprep.subr.mxu0 0.0
  %55 = vmatpush1.msra.mxu0 %v27
  %56 = vmatprep.subr.mxu0 0.0
  %57 = vmatpush1.msra.mxu0 %v28
  %58 = vmatprep.subr.mxu0 0.0
  %59 = vmatpush1.msra.mxu0 %v29
  %60 = vmatprep.subr.mxu0 0.0
  %61 = vmatpush1.msra.mxu0 %v30
  %62 = vmatprep.subr.mxu0 0.0
  %63 = vmatpush1.msra.mxu0 %v31
  %64 = vmatprep.subr.mxu0 0.0
  %65 = vmatpush1.msra.mxu0 0.0
  %66 = vmatprep.subr.mxu0 0.0
  %67 = vmatpush1.msra.mxu0 0.0
  %68 = vmatprep.subr.mxu0 0.0
  %69 = vmatpush1.msra.mxu0 0.0
  %70 = vmatprep.subr.mxu0 0.0
  %71 = vmatpush1.msra.mxu0 0.0
  %72 = vmatprep.subr.mxu0 0.0
  %73 = vmatpush1.msra.mxu0 0.0
  %74 = vmatprep.subr.mxu0 0.0
  %75 = vmatpush1.msra.mxu0 0.0
  %76 = vmatprep.subr.mxu0 0.0
  %77 = vmatpush1.msra.mxu0 0.0
  %78 = vmatprep.subr.mxu0 0.0
  %79 = vmatpush1.msra.mxu0 0.0
  %80 = vmatprep.subr.mxu0 0.0
  %81 = vmatpush1.msra.mxu0 0.0
  %82 = vmatprep.subr.mxu0 0.0
  %83 = vmatpush1.msra.mxu0 0.0
  %84 = vmatprep.subr.mxu0 0.0
  %85 = vmatpush1.msra.mxu0 0.0
  %86 = vmatprep.subr.mxu0 0.0
  %87 = vmatpush1.msra.mxu0 0.0
  %88 = vmatprep.subr.mxu0 0.0
  %89 = vmatpush1.msra.mxu0 0.0
  %90 = vmatprep.subr.mxu0 0.0
  %91 = vmatpush1.msra.mxu0 0.0
  %92 = vmatprep.subr.mxu0 0.0
  %93 = vmatpush1.msra.mxu0 0.0
  %94 = vmatprep.subr.mxu0 0.0
  %95 = vmatpush1.msra.mxu0 0.0
  %96 = vmatprep.mubr.f32.mxu0 0.0
  %97 = vmatmul.mubr.f32.gmra.mrb[0].mxu0 %v15
  %v98 = vpop.f32.mrb[0].mxu0
  %v99 = vadd.f32 0.0, %v98
  %v100 = vpop.f32.mrb[0].mxu0
  %101 = vdwg.mxu0
  %102 = vxpose.xlu0.b32.start [1/16] %v99, 128
  %103 = vxpose.xlu0.b32.cont [2/16] 0.0, 128
  %104 = vxpose.xlu0.b32.cont [3/16] 0.0, 128
  %105 = vxpose.xlu0.b32.cont [4/16] 0.0, 128
  %106 = vxpose.xlu0.b32.cont [5/16] 0.0, 128
  %107 = vxpose.xlu0.b32.cont [6/16] 0.0, 128
  %108 = vxpose.xlu0.b32.cont [7/16] 0.0, 128
  %109 = vxpose.xlu0.b32.cont [8/16] 0.0, 128
  %110 = vxpose.xlu0.b32.cont [9/16] 0.0, 128
  %111 = vxpose.xlu0.b32.cont [10/16] 0.0, 128
  %112 = vxpose.xlu0.b32.cont [11/16] 0.0, 128
  %113 = vxpose.xlu0.b32.cont [12/16] 0.0, 128
  %114 = vxpose.xlu0.b32.cont [13/16] 0.0, 128
  %115 = vxpose.xlu0.b32.cont [14/16] 0.0, 128
  %116 = vxpose.xlu0.b32.cont [15/16] 0.0, 128
  %117 = vxpose.xlu0.b32.end [16/16] 0.0, 128
  %v118 = vpop.trf.xlu0
  %v119 = vpop.trf.xlu0
  %v120 = vpop.trf.xlu0
  %v121 = vpop.trf.xlu0
  %v122 = vpop.trf.xlu0
  %v123 = vpop.trf.xlu0
  %v124 = vpop.trf.xlu0
  %v125 = vpop.trf.xlu0
  %v126 = vpop.trf.xlu0
  %v127 = vpop.trf.xlu0
  %v128 = vpop.trf.xlu0
  %v129 = vpop.trf.xlu0
  %v130 = vpop.trf.xlu0
  %v131 = vpop.trf.xlu0
  %v132 = vpop.trf.xlu0
  %v133 = vpop.trf.xlu0
  %s134 = sld [smem:[#allocation2]]
  %v135 = vstv %s134
  %v136 = vadd.f32 %v118, %v135
  %v137 = vxor.u32 %v136, 2147483648
  %v138 = vmul.f32 %v137, 1.442695
  %v139 = vpow.pop %v138
  %v140 = vadd.f32 %v139, 1.0
  %v141 = vrcp.pop %v140
  %v142 = vmul.f32 1.0, %v141
  %vm143 = vcmask 11264
  %144 = vst.msk [vmem:[%s3] sm:$0xf] %vm143, %v142
  // Predicated region
  $region14: #{tpu_custom_call.1} parent=0 // pred_check
    _
  $region15: #{tpu_custom_call.1} parent=0 // pred_check_branch
    %146 = sbr.rel (0) target = $region17
  $region16: #{tpu_custom_call.1} parent=0 // pred_region
    _
  $region17: #{tpu_custom_call.1} parent=0 // pred_fallthru
    _
  // Predicated region
  $region18: #{tpu_custom_call.1} parent=0 // pred_check
    _
  $region19: #{tpu_custom_call.1} parent=0 // pred_check_branch
    %148 = sbr.rel (0) target = $region21
  $region20: #{tpu_custom_call.1} parent=0 // pred_region
    _
  $region21: #{tpu_custom_call.1} parent=0 // pred_fallthru
    _

</llo_original>
